<compile_context>
chip_gen: v7x
topology: tpu7x:2x2x1
jax: 0.10.0
libtpu: 0.0.40
codegen_flags: <defaults>
</compile_context>

<pallas_src>
import jax
import jax.numpy as jnp
from jax.experimental import pallas as pl
from jax.experimental.pallas import tpu as pltpu


def _relu_kernel(x_ref, o_ref):
    # Single VPU op per vreg; no constant materialization.
    o_ref[...] = jnp.maximum(x_ref[...], 0)


def _vmem_capacity_bytes():
    """Physical VMEM per core, with a conservative (v7x-class) fallback."""
    try:
        info = pltpu.get_tpu_info()
        vmem = getattr(info, "vmem_capacity_bytes", None)
        if vmem:
            return int(vmem)
    except Exception:
        pass
    return 64 << 20


def _block_bytes_and_vmem_limit():
    """Pick block size and scoped-VMEM limit from the chip's VMEM capacity.

    Double-buffered in + out = 4 slabs per block; keep that well under the
    physical VMEM with headroom for Mosaic internals.  Lands on 8 MiB blocks /
    40 MiB scoped limit on v5e/v6e (128 MiB VMEM) and v7x (64 MiB VMEM):
    measured >=86% of HBM roofline vs ~72-85% at the previous 2 MiB blocks
    (the 2 MiB step was ~28% per-step overhead on v7x's 3.2 TB/s HBM).
    """
    vmem = _vmem_capacity_bytes()
    block = min(8 << 20, max(2 << 20, vmem // 8))
    vmem_limit = min(vmem - (8 << 20), 4 * block + (8 << 20))
    return block, vmem_limit


def _choose_lane(total):
    """Widest lane-dense last dim that evenly divides the flat length.

    Falls back to lane=128; any ragged tail (< 128 elements) is handled in the
    wrapper with plain jnp.maximum (no pad+slice HBM round trip)."""
    for lane in (2048, 1024, 512, 256, 128):
        if total % lane == 0:
            return lane
    return 128


def _choose_block_rows(rows, lane, itemsize, block_bytes):
    br = block_bytes // (lane * itemsize)
    br = max(32, (br // 32) * 32)  # multiple of 32 rows: legal sublane tiling for f32/bf16/i8
    if br >= rows:
        return rows  # block spans the full row axis (always a legal block dim)
    return br


def _relu_2d(x2d, block_rows, vmem_limit, donate):
    rows, lane = x2d.shape
    grid = (pl.cdiv(rows, block_rows),)
    return pl.pallas_call(
        _relu_kernel,
        out_shape=jax.ShapeDtypeStruct((rows, lane), x2d.dtype),
        grid=grid,
        in_specs=[pl.BlockSpec((block_rows, lane), lambda i: (i, 0))],
        out_specs=pl.BlockSpec((block_rows, lane), lambda i: (i, 0)),
        # Aliasing output onto input halves peak HBM footprint when the caller
        # donates x (no bandwidth change: still one read + one write pass).
        input_output_aliases=({0: 0} if donate else {}),
        compiler_params=pltpu.CompilerParams(
            # "parallel": lets Mosaic shard grid steps across both TCs on v7x;
            # measured no-op on single-TC v5e/v6e.
            # TODO(synk): profile v7x to confirm both TCs stay busy; if not,
            # add an explicit leading CORE_PARALLEL axis over the row range.
            dimension_semantics=("parallel",),
            vmem_limit_bytes=int(vmem_limit),
        ),
    )(x2d)


def customized_relu(x, num_channels, donate=False):
    """Pallas equivalent of CustomizedRelu.forward (F.relu), NCHW layout."""
    # Matches the module's channel assertion (channels on axis 1).
    assert x.shape[1] == num_channels

    orig_shape = x.shape
    total = x.size
    itemsize = jnp.dtype(x.dtype).itemsize

    if total == 0:
        return x

    lane = _choose_lane(total)
    bulk = (total // lane) * lane
    tail = total - bulk

    flat = jnp.reshape(x, (total,))

    if bulk == 0:
        # Tiny tensor (< 128 elements): not worth a kernel launch.
        return jnp.reshape(jnp.maximum(flat, 0), orig_shape)

    block_bytes, vmem_limit = _block_bytes_and_vmem_limit()
    rows = bulk // lane
    block_rows = _choose_block_rows(rows, lane, itemsize, block_bytes)

    if tail == 0:
        # Fast path (common case): pure reshape in/out, no extra HBM passes.
        x2d = jnp.reshape(flat, (rows, lane))
        out2d = _relu_2d(x2d, block_rows, vmem_limit, donate)
        return jnp.reshape(out2d, orig_shape)

    # Ragged tail (< 128 elements): kernel on the 128-aligned bulk, tail via
    # plain jnp.maximum — cheaper than padding/slicing the whole tensor.
    x2d = jnp.reshape(flat[:bulk], (rows, lane))
    out_bulk = jnp.reshape(_relu_2d(x2d, block_rows, vmem_limit, donate=False), (bulk,))
    out_tail = jnp.maximum(flat[bulk:], 0)
    return jnp.reshape(jnp.concatenate([out_bulk, out_tail]), orig_shape)


if __name__ == "__main__":
    # Module __init__ only stores num_channels / batch_size; no parameters.
    batch_size = 2
    num_channels = 4
    H = W = 16

    key = jax.random.PRNGKey(0)
    x = jax.random.normal(key, (batch_size, num_channels, H, W), dtype=jnp.float32)

    y = customized_relu(x, num_channels)
    y = jax.block_until_ready(y)

    # Sanity check against plain JAX relu.
    ref = jnp.maximum(x, 0.0)
    assert y.shape == x.shape and y.dtype == x.dtype
    assert bool(jnp.allclose(y, ref)), "mismatch vs reference relu"

    print("KERNEL_OK")
</pallas_src>

<mosaic_0001>
module attributes {stable_mosaic.version = 11 : i64} {
  func.func @_relu_kernel(%arg0: i32, %arg1: memref<1x2048xf32, #tpu.memory_space<vmem>>, %arg2: memref<1x2048xf32, #tpu.memory_space<vmem>>) attributes {dimension_semantics = [#tpu.dimension_semantics<parallel>], iteration_bounds = array<i64: 1>, scalar_prefetch = 0 : i64, scratch_operands = 0 : i64, tpu.core_type = #tpu.core_type<tc>, window_params = [{transform_indices = @transform_0, window_bounds = array<i64: 1, 2048>}, {transform_indices = @transform_1, window_bounds = array<i64: 1, 2048>}]} {
    %c0 = arith.constant 0 : index
    %c0_0 = arith.constant 0 : index
    %0 = vector.load %arg1[%c0, %c0_0] : memref<1x2048xf32, #tpu.memory_space<vmem>>, vector<1x2048xf32>
    %cst = arith.constant 0.000000e+00 : f32
    %1 = vector.broadcast %cst : f32 to vector<1x2048xf32>
    %2 = arith.maximumf %0, %1 : vector<1x2048xf32>
    %c0_1 = arith.constant 0 : index
    %c0_2 = arith.constant 0 : index
    %3 = vector.load %arg2[%c0_1, %c0_2] : memref<1x2048xf32, #tpu.memory_space<vmem>>, vector<1x2048xf32>
    tpu.vector_store %arg2[%c0_1, %c0_2], %2 {strides = array<i32>} : memref<1x2048xf32, #tpu.memory_space<vmem>>, vector<1x2048xf32>,
    return
  }
  func.func @transform_0(%arg0: i32) -> (i32, i32) {
    %c0_i32 = arith.constant 0 : i32
    %c0_i32_0 = arith.constant 0 : i32
    return %arg0, %c0_i32 : i32, i32
  }
  func.func @transform_1(%arg0: i32) -> (i32, i32) {
    %c0_i32 = arith.constant 0 : i32
    %c0_i32_0 = arith.constant 0 : i32
    return %arg0, %c0_i32 : i32, i32
  }
}

</mosaic_0001>

<llo_original>
// kernel: tpu_custom_call.1
$region0: #{tpu_custom_call.1}
  #allocation0 [shape = 'u32[]', space=smem, size = 0x4, offset = 0x4, fixed_abs, tag = 'smem constant byte address 0x4 - core index']
  #allocation1 [shape = 'u32[144,128]{1,0:T(1,128)}', space=vmem, size = 0x12000, scoped, tag = 'internal scratch']
  %s0 = inlined_call_operand.hbm [shape: f32[1,2048], index: 0, kind: input, shape index: {}]
  %s1 = inlined_call_operand.hbm [shape: f32[1,2048], index: 1, kind: output, shape index: {}]
  %s2 = sld [smem:[#allocation0]]
  $region18: #{tpu_custom_call.1} parent=0
    _
  %s4 = ssub.s32 1, %s2
  %s5 = scalar_select 0, %s4, %s2
  $region1: #{tpu_custom_call.1} parent=0
    #allocation2 [shape = 'u8[8192]{0}', space=vmem, size = 0x2000, scoped, tag = 'input window, operand 0, single buffered']
    #allocation3 [shape = 's32[1]{0}', space=sflag, size = 0x4, scoped, tag = 'scoped memory for tpu_custom_call.1']
    #allocation4 [shape = 's32[1]{0}', space=sflag, size = 0x4, scoped, tag = 'scoped memory for tpu_custom_call.1']
    #allocation5 [shape = 'u8[8192]{0}', space=vmem, size = 0x2000, scoped, tag = 'output window, operand 0, single buffered']
    %6 = vsyncpa [#allocation3], 0
    %7 = vsyncpa [#allocation4], 0
    // Predicated region
    $region2: #{tpu_custom_call.1} parent=1 // pred_check
      _
    $region3: #{tpu_custom_call.1} parent=1 // pred_check_branch
      %9 = sbr.rel (0) target = $region5
    $region4: #{tpu_custom_call.1} parent=1 // pred_region
      %s11 = ssub.s32 256, 256
      %12 = vsyncadd [#allocation3], %s11
      %s14 = sshll.u32 [#allocation2], 4
      %s15 = int_to_ptr.vmem [resolvable:$true] %s14
      %17 = dma.hbm_to_vmem [thread:$0]  %s0, 256, %s15, [#allocation3]
    $region5: #{tpu_custom_call.1} parent=1 // pred_fallthru
      _
    // Predicated region
    $region6: #{tpu_custom_call.1} parent=1 // pred_check
      _
    $region7: #{tpu_custom_call.1} parent=1 // pred_check_branch
      %19 = sbr.rel (0) target = $region9
    $region8: #{tpu_custom_call.1} parent=1 // pred_region
      %20 = dma.done [#allocation3], 256
    $region9: #{tpu_custom_call.1} parent=1 // pred_fallthru
      _
    %v21 = vld [vmem:[#allocation2] sm:$0xff]
    %v22 = vld [vmem:[#allocation2 + $0x8] sm:$0xff]
    %v23 = vmax.f32 %v21, 0.0
    %v24 = vmax.f32 %v22, 0.0
    %25 = vst [vmem:[#allocation5] sm:$0xff] %v23
    %26 = vst [vmem:[#allocation5 + $0x8] sm:$0xff] %v24
    // Predicated region
    $region10: #{tpu_custom_call.1} parent=1 // pred_check
      _
    $region11: #{tpu_custom_call.1} parent=1 // pred_check_branch
      %28 = sbr.rel (0) target = $region13
    $region12: #{tpu_custom_call.1} parent=1 // pred_region
      %s30 = ssub.s32 256, 256
      %31 = vsyncadd [#allocation4], %s30
      %s33 = sshll.u32 [#allocation5], 4
      %s34 = int_to_ptr.vmem [resolvable:$true] %s33
      %36 = dma.vmem_to_hbm [thread:$0]  %s34, 256, %s1, [#allocation4]
    $region13: #{tpu_custom_call.1} parent=1 // pred_fallthru
      _
    // Predicated region
    $region14: #{tpu_custom_call.1} parent=1 // pred_check
      _
    $region15: #{tpu_custom_call.1} parent=1 // pred_check_branch
      %38 = sbr.rel (0) target = $region17
    $region16: #{tpu_custom_call.1} parent=1 // pred_region
      %39 = dma.done [#allocation4], 256
    $region17: #{tpu_custom_call.1} parent=1 // pred_fallthru
      _
    %40 = vsyncpa [#allocation3], 1
    %41 = vsyncpa [#allocation4], 1

</llo_original>
